<compile_context>
chip_gen: v6e
topology: v6e:2x2x1
jax: 0.10.0
libtpu: 0.0.40
codegen_flags: <defaults>
</compile_context>

<pallas_src>
import jax
import jax.numpy as jnp
from jax.experimental import pallas as pl
from jax.experimental.pallas import tpu as pltpu


def _round_up(n, m):
    return ((n + m - 1) // m) * m


def fused_encoder_kernel(x_ref, w_ref, b_ref, o_ref):
    # Single MXU matmul on the pre-composed weight, fp32 accumulate, bias add,
    # lane-dense (128-wide) store.
    o_ref[...] = (
        jnp.dot(x_ref[...], w_ref[...], preferred_element_type=jnp.float32)
        + b_ref[...]
    ).astype(o_ref.dtype)


def encoder_forward(x, params, *, block_m=512):
    """Forward pass of Encoder: fc3(fc2(fc1(x))) with no activations.

    x: (B, in_shape) float32.
    params: dict with transposed weights w{1,2,3} of shape (in, out) and
            biases b{1,2,3} of shape (1, out).
    """
    B, in_dim = x.shape
    L = params["w3"].shape[1]

    # Host-side fold of the three Linear layers (valid: no activations between them).
    w = params["w1"] @ params["w2"] @ params["w3"]
    b = (params["b1"] @ params["w2"] + params["b2"]) @ params["w3"] + params["b3"]

    # Padding for clean TPU layouts.
    in_pad = _round_up(in_dim, 8)         # sublane-aligned K
    l_pad = _round_up(L, 128)             # lane-dense N (unmasked stores)
    tm = min(block_m, _round_up(B, 8))    # batch tile (multiple of 8)
    b_rows = _round_up(B, tm)             # padded batch so the grid divides evenly

    x_p = jnp.zeros((b_rows, in_pad), jnp.float32).at[:B, :in_dim].set(x)
    w_p = jnp.zeros((in_pad, l_pad), jnp.float32).at[:in_dim, :L].set(w)
    b_p = jnp.zeros((1, l_pad), jnp.float32).at[:, :L].set(b)

    grid = (b_rows // tm,)
    flops = 2 * b_rows * in_pad * l_pad
    bytes_accessed = 4 * (x_p.size + w_p.size + b_p.size + b_rows * l_pad)

    out_p = pl.pallas_call(
        fused_encoder_kernel,
        out_shape=jax.ShapeDtypeStruct((b_rows, l_pad), jnp.float32),
        grid_spec=pltpu.PrefetchScalarGridSpec(
            num_scalar_prefetch=0,
            grid=grid,
            in_specs=[
                pl.BlockSpec((tm, in_pad), lambda i: (i, 0)),      # batch tile of x
                pl.BlockSpec((in_pad, l_pad), lambda i: (0, 0)),   # resident fused weight
                pl.BlockSpec((1, l_pad), lambda i: (0, 0)),        # resident fused bias
            ],
            out_specs=pl.BlockSpec((tm, l_pad), lambda i: (i, 0)),
        ),
        compiler_params=pltpu.CompilerParams(
            dimension_semantics=("parallel",),
        ),
        cost_estimate=pl.CostEstimate(
            flops=flops, transcendentals=0, bytes_accessed=bytes_accessed),
    )(x_p, w_p, b_p)

    return out_p[:B, :L]


def init_params(key, in_shape, L):
    """Deterministic init mimicking nn.Linear's uniform(-1/sqrt(fan_in), 1/sqrt(fan_in)).
    Weights stored transposed: (in_features, out_features)."""
    dims = [(in_shape, 512), (512, 256), (256, L)]
    params = {}
    for i, (fin, fout) in enumerate(dims, start=1):
        key, kw, kb = jax.random.split(key, 3)
        bound = 1.0 / (fin ** 0.5)
        params[f"w{i}"] = jax.random.uniform(
            kw, (fin, fout), jnp.float32, minval=-bound, maxval=bound)
        params[f"b{i}"] = jax.random.uniform(
            kb, (1, fout), jnp.float32, minval=-bound, maxval=bound)
    return params


if __name__ == "__main__":
    # Module-consistent small shapes: K=2, M=3 -> in_shape = 1 + 2*3 + 2*2*3 = 19; L=8.
    K, M, L = 2, 3, 8
    in_shape = 1 + 2 * M + 2 * K * M
    batch = 4

    key = jax.random.PRNGKey(0)
    key, kx = jax.random.split(key)
    x = jax.random.normal(kx, (batch, in_shape), jnp.float32)
    params = init_params(key, in_shape, L)

    out = encoder_forward(x, params)
    out = jax.block_until_ready(out)

    # Reference: the original (unfused) 3-matmul chain.
    ref = x
    for i in (1, 2, 3):
        ref = ref @ params[f"w{i}"] + params[f"b{i}"]

    assert out.shape == (batch, L)
    assert jnp.allclose(out, ref, atol=1e-4, rtol=1e-4), "mismatch vs reference"

    print("KERNEL_OK")
</pallas_src>

<mosaic_0001>
module attributes {stable_mosaic.version = 11 : i64} {
  func.func @fused_encoder_kernel(%arg0: i32, %arg1: memref<8x24xf32, #tpu.memory_space<vmem>>, %arg2: memref<24x128xf32, #tpu.memory_space<vmem>>, %arg3: memref<1x128xf32, #tpu.memory_space<vmem>>, %arg4: memref<8x128xf32, #tpu.memory_space<vmem>>) attributes {dimension_semantics = [#tpu.dimension_semantics<parallel>], iteration_bounds = array<i64: 1>, scalar_prefetch = 0 : i64, scratch_operands = 0 : i64, tpu.core_type = #tpu.core_type<tc>, window_params = [{transform_indices = @transform_0, window_bounds = array<i64: 8, 24>}, {pipeline_mode = #tpu.pipeline_mode<synchronous>, transform_indices = @transform_1, window_bounds = array<i64: 24, 128>}, {pipeline_mode = #tpu.pipeline_mode<synchronous>, transform_indices = @transform_2, window_bounds = array<i64: 1, 128>}, {transform_indices = @transform_3, window_bounds = array<i64: 8, 128>}]} {
    %c0 = arith.constant 0 : index
    %c0_0 = arith.constant 0 : index
    %0 = vector.load %arg1[%c0, %c0_0] : memref<8x24xf32, #tpu.memory_space<vmem>>, vector<8x24xf32>
    %c0_1 = arith.constant 0 : index
    %c0_2 = arith.constant 0 : index
    %1 = vector.load %arg2[%c0_1, %c0_2] : memref<24x128xf32, #tpu.memory_space<vmem>>, vector<24x128xf32>
    %cst = arith.constant dense<0.000000e+00> : vector<8x128xf32>
    %2 = tpu.matmul %0, %1, %cst {dimension_numbers = #tpu.dot_dimension_numbers<[1], [0], [0], [1], [0, 0, 1, 1], [], []>} : vector<8x24xf32>, vector<24x128xf32>, vector<8x128xf32> -> vector<8x128xf32>
    %c0_3 = arith.constant 0 : index
    %c0_4 = arith.constant 0 : index
    %3 = vector.load %arg3[%c0_3, %c0_4] : memref<1x128xf32, #tpu.memory_space<vmem>>, vector<1x128xf32>
    %4 = vector.broadcast %3 : vector<1x128xf32> to vector<8x128xf32>
    %5 = arith.addf %2, %4 : vector<8x128xf32>
    %c0_5 = arith.constant 0 : index
    %c0_6 = arith.constant 0 : index
    %6 = vector.load %arg4[%c0_5, %c0_6] : memref<8x128xf32, #tpu.memory_space<vmem>>, vector<8x128xf32>
    tpu.vector_store %arg4[%c0_5, %c0_6], %5 {strides = array<i32>} : memref<8x128xf32, #tpu.memory_space<vmem>>, vector<8x128xf32>,
    return
  }
  func.func @transform_0(%arg0: i32) -> (i32, i32) {
    %c0_i32 = arith.constant 0 : i32
    %c0_i32_0 = arith.constant 0 : i32
    return %arg0, %c0_i32 : i32, i32
  }
  func.func @transform_1(%arg0: i32) -> (i32, i32) {
    %c0_i32 = arith.constant 0 : i32
    %c0_i32_0 = arith.constant 0 : i32
    %c0_i32_1 = arith.constant 0 : i32
    return %c0_i32, %c0_i32_0 : i32, i32
  }
  func.func @transform_2(%arg0: i32) -> (i32, i32) {
    %c0_i32 = arith.constant 0 : i32
    %c0_i32_0 = arith.constant 0 : i32
    %c0_i32_1 = arith.constant 0 : i32
    return %c0_i32, %c0_i32_0 : i32, i32
  }
  func.func @transform_3(%arg0: i32) -> (i32, i32) {
    %c0_i32 = arith.constant 0 : i32
    %c0_i32_0 = arith.constant 0 : i32
    return %arg0, %c0_i32 : i32, i32
  }
}

</mosaic_0001>

<llo_original>
// kernel: tpu_custom_call.1
$region0: #{tpu_custom_call.1}
  #allocation0 [shape = 'u32[]', space=smem, size = 0x4, offset = 0x4, fixed_abs, tag = 'smem constant byte address 0x4 - core index']
  #allocation1 [shape = 'u32[144,128]{1,0:T(1,128)}', space=vmem, size = 0x12000, scoped, tag = 'internal scratch']
  %s0 = inlined_call_operand.hbm [shape: f32[8,24], index: 0, kind: input, shape index: {}]
  %s1 = inlined_call_operand.hbm [shape: f32[24,128], index: 1, kind: input, shape index: {}]
  %s2 = inlined_call_operand.vmem [shape: f32[1,128], index: 2, kind: input, shape index: {}]
  %s3 = inlined_call_operand.hbm [shape: f32[8,128], index: 3, kind: output, shape index: {}]
  %s4 = sld [smem:[#allocation0]]
  $region30: #{tpu_custom_call.1} parent=0
    _
  %s6 = ssub.s32 1, %s4
  %s7 = scalar_select 0, %s6, %s4
  $region1: #{tpu_custom_call.1} parent=0
    #allocation2 [shape = 'u8[4096]{0}', space=vmem, size = 0x1000, scoped, tag = 'input window, operand 0, single buffered']
    #allocation3 [shape = 's32[1]{0}', space=sflag, size = 0x4, scoped, tag = 'scoped memory for tpu_custom_call.1']
    #allocation4 [shape = 's32[1]{0}', space=sflag, size = 0x4, scoped, tag = 'scoped memory for tpu_custom_call.1']
    #allocation5 [shape = 'u8[12288]{0}', space=vmem, size = 0x3000, scoped, tag = 'input window, operand 1, single buffered']
    #allocation6 [shape = 's32[1]{0}', space=sflag, size = 0x4, scoped, tag = 'scoped memory for tpu_custom_call.1']
    #allocation7 [shape = 'u8[4096]{0}', space=vmem, size = 0x1000, scoped, tag = 'output window, operand 0, single buffered']
    %8 = vsyncpa [#allocation3], 0
    %9 = vsyncpa [#allocation6], 0
    %10 = vsyncpa [#allocation4], 0
    // Predicated region
    $region2: #{tpu_custom_call.1} parent=1 // pred_check
      _
    $region3: #{tpu_custom_call.1} parent=1 // pred_check_branch
      %12 = sbr.rel (0) target = $region5
    $region4: #{tpu_custom_call.1} parent=1 // pred_region
      %s14 = ssub.s32 128, 128
      %15 = vsyncadd [#allocation3], %s14
      %s17 = sshll.u32 [#allocation2], 4
      %s18 = int_to_ptr.vmem [resolvable:$true] %s17
      %20 = dma.hbm_to_vmem [thread:$0]  %s0, 128, %s18, [#allocation3]
    $region5: #{tpu_custom_call.1} parent=1 // pred_fallthru
      _
    // Predicated region
    $region6: #{tpu_custom_call.1} parent=1 // pred_check
      _
    $region7: #{tpu_custom_call.1} parent=1 // pred_check_branch
      %22 = sbr.rel (0) target = $region9
    $region8: #{tpu_custom_call.1} parent=1 // pred_region
      %s24 = ssub.s32 384, 384
      %25 = vsyncadd [#allocation6], %s24
      %s26 = sshll.u32 [#allocation5], 4
      %s27 = int_to_ptr.vmem [resolvable:$true] %s26
      %32 = dma.hbm_to_vmem [thread:$0]  %s1, 384, %s27, [#allocation6], 128, 128, 8
    $region9: #{tpu_custom_call.1} parent=1 // pred_fallthru
      _
    // Predicated region
    $region10: #{tpu_custom_call.1} parent=1 // pred_check
      _
    $region11: #{tpu_custom_call.1} parent=1 // pred_check_branch
      %34 = sbr.rel (0) target = $region13
    $region12: #{tpu_custom_call.1} parent=1 // pred_region
      _
    $region13: #{tpu_custom_call.1} parent=1 // pred_fallthru
      _
    // Predicated region
    $region14: #{tpu_custom_call.1} parent=1 // pred_check
      _
    $region15: #{tpu_custom_call.1} parent=1 // pred_check_branch
      %36 = sbr.rel (0) target = $region17
    $region16: #{tpu_custom_call.1} parent=1 // pred_region
      %37 = dma.done [#allocation3], 128
    $region17: #{tpu_custom_call.1} parent=1 // pred_fallthru
      _
    // Predicated region
    $region18: #{tpu_custom_call.1} parent=1 // pred_check
      _
    $region19: #{tpu_custom_call.1} parent=1 // pred_check_branch
      %39 = sbr.rel (0) target = $region21
    $region20: #{tpu_custom_call.1} parent=1 // pred_region
      %40 = dma.done [#allocation6], 384
    $region21: #{tpu_custom_call.1} parent=1 // pred_fallthru
      _
    %v41 = vld [vmem:[#allocation2] sm:$0xff]
    %v42 = vld [vmem:[#allocation5] sm:$0xff]
    %v43 = vld [vmem:[#allocation5 + $0x8] sm:$0xff]
    %v44 = vld [vmem:[#allocation5 + $0x10] sm:$0xff]
    %v45 = vld [vmem:[%s2] sm:$0x1]
    %v47 = vlaneseq
    %v48 = vshrl.u32 %v47, 7
    %v49 = vsub.s32 0, %v48
    %v50 = vrot.slane %v45, %v49
    %vm52 = vcmask 195584
    %v54 = vsel %vm52, %v41, 0
    %56 = vmatprep.subr.mxu0 0.0
    %57 = vmatpush1.msra.mxu0 0.0
    %58 = vmatprep.subr.mxu0 0.0
    %59 = vmatpush1.msra.mxu0 0.0
    %60 = vmatprep.subr.mxu0 0.0
    %61 = vmatpush1.msra.mxu0 0.0
    %62 = vmatprep.subr.mxu0 0.0
    %63 = vmatpush1.msra.mxu0 0.0
    %64 = vmatprep.subr.mxu0 0.0
    %65 = vmatpush1.msra.mxu0 0.0
    %66 = vmatprep.subr.mxu0 0.0
    %67 = vmatpush1.msra.mxu0 0.0
    %68 = vmatprep.subr.mxu0 0.0
    %69 = vmatpush1.msra.mxu0 0.0
    %70 = vmatprep.subr.mxu0 0.0
    %71 = vmatpush1.msra.mxu0 0.0
    %72 = vmatprep.subr.mxu0 0.0
    %73 = vmatpush1.msra.mxu0 0.0
    %74 = vmatprep.subr.mxu0 0.0
    %75 = vmatpush1.msra.mxu0 0.0
    %76 = vmatprep.subr.mxu0 0.0
    %77 = vmatpush1.msra.mxu0 0.0
    %78 = vmatprep.subr.mxu0 0.0
    %79 = vmatpush1.msra.mxu0 0.0
    %80 = vmatprep.subr.mxu0 0.0
    %81 = vmatpush1.msra.mxu0 0.0
    %82 = vmatprep.subr.mxu0 0.0
    %83 = vmatpush1.msra.mxu0 %v44
    %84 = vmatprep.subr.mxu0 0.0
    %85 = vmatpush1.msra.mxu0 %v43
    %86 = vmatprep.subr.mxu0 0.0
    %87 = vmatpush1.msra.mxu0 %v42
    %88 = vmatprep.subr.mxu0 0.0
    %89 = vmatpush2.msra.mxu0 0.0
    %90 = vmatprep.subr.mxu0 0.0
    %91 = vmatpush2.msra.mxu0 0.0
    %92 = vmatprep.subr.mxu0 0.0
    %93 = vmatpush2.msra.mxu0 0.0
    %94 = vmatprep.subr.mxu0 0.0
    %95 = vmatpush2.msra.mxu0 0.0
    %96 = vmatprep.subr.mxu0 0.0
    %97 = vmatpush2.msra.mxu0 0.0
    %98 = vmatprep.subr.mxu0 0.0
    %99 = vmatpush2.msra.mxu0 0.0
    %100 = vmatprep.subr.mxu0 0.0
    %101 = vmatpush2.msra.mxu0 0.0
    %102 = vmatprep.subr.mxu0 0.0
    %103 = vmatpush2.msra.mxu0 0.0
    %104 = vmatprep.subr.mxu0 0.0
    %105 = vmatpush2.msra.mxu0 0.0
    %106 = vmatprep.subr.mxu0 0.0
    %107 = vmatpush2.msra.mxu0 0.0
    %108 = vmatprep.subr.mxu0 0.0
    %109 = vmatpush2.msra.mxu0 0.0
    %110 = vmatprep.subr.mxu0 0.0
    %111 = vmatpush2.msra.mxu0 0.0
    %112 = vmatprep.subr.mxu0 0.0
    %113 = vmatpush2.msra.mxu0 0.0
    %114 = vmatprep.subr.mxu0 0.0
    %115 = vmatpush2.msra.mxu0 0.0
    %116 = vmatprep.subr.mxu0 0.0
    %117 = vmatpush2.msra.mxu0 0.0
    %118 = vmatprep.subr.mxu0 0.0
    %119 = vmatpush2.msra.mxu0 0.0
    %120 = vmatprep.mubr.f32.mxu0 0.0
    %121 = vmatmul.mubr.f32.gmra.mxu0 %v54
    %v122 = vpop.f32.mrf.mxu0
    %v123 = vadd.f32 %v50, %v122
    %v124 = vpop.f32.mrf.mxu0
    %125 = vdwg.mxu0
    %126 = vst [vmem:[#allocation7] sm:$0xff] %v123
    // Predicated region
    $region22: #{tpu_custom_call.1} parent=1 // pred_check
      _
    $region23: #{tpu_custom_call.1} parent=1 // pred_check_branch
      %128 = sbr.rel (0) target = $region25
    $region24: #{tpu_custom_call.1} parent=1 // pred_region
      %s130 = ssub.s32 128, 128
      %131 = vsyncadd [#allocation4], %s130
      %s133 = sshll.u32 [#allocation7], 4
      %s134 = int_to_ptr.vmem [resolvable:$true] %s133
      %136 = dma.vmem_to_hbm [thread:$0]  %s134, 128, %s3, [#allocation4]
    $region25: #{tpu_custom_call.1} parent=1 // pred_fallthru
      _
    // Predicated region
    $region26: #{tpu_custom_call.1} parent=1 // pred_check
      _
    $region27: #{tpu_custom_call.1} parent=1 // pred_check_branch
      %138 = sbr.rel (0) target = $region29
    $region28: #{tpu_custom_call.1} parent=1 // pred_region
      %139 = dma.done [#allocation4], 128
    $region29: #{tpu_custom_call.1} parent=1 // pred_fallthru
      _
    %140 = vsyncpa [#allocation3], 1
    %141 = vsyncpa [#allocation6], 1
    %142 = vsyncpa [#allocation4], 1

</llo_original>
